<compile_context>
chip_gen: v6e
topology: v6e:2x2x1
jax: 0.10.0
libtpu: 0.0.40
codegen_flags: <defaults>
</compile_context>

<pallas_src>
import jax
import jax.numpy as jnp
from jax.experimental import pallas as pl
from jax.experimental.pallas import tpu as pltpu


def _mode_matmul_kernel(x_ref, w_ref, o_ref):
    # x_ref: (TM, B, 2*Ci), w_ref: (TM, 2*Ci, Cop), o_ref: (TM, B, Cop)
    # One batched-over-modes real matmul on the MXU with f32 accumulation.
    o_ref[...] = jnp.einsum(
        "mbi,mio->mbo", x_ref[...], w_ref[...],
        preferred_element_type=jnp.float32,
    ).astype(o_ref.dtype)


def _pick_mode_tile(M, per_mode_bytes, vmem_budget=8 * 1024 * 1024):
    """Largest divisor of M whose double-buffered tile footprint fits the VMEM
    budget, preferring >=2 grid steps so the 'parallel' grid axis can be split
    across TensorCores (v7x megacore)."""
    divisors = [d for d in range(1, M + 1) if M % d == 0]
    fitting = [d for d in divisors if 2 * d * per_mode_bytes <= vmem_budget] or [1]
    multi = [d for d in fitting if M // d >= 2]
    return max(multi) if multi else max(fitting)


def spectral_conv1d_forward(x, params, *, modes1, gabor_len):
    w1r, w1i = params["w1r"], params["w1i"]            # (Ci, Co, M)
    gamma, fwhm, w2 = params["gamma"], params["fwhm"], params["w2"]
    B, Ci, N = x.shape
    Co = w1r.shape[1]
    M = modes1
    K = gamma.shape[0]

    # ---- GaborConv1d.forward (tiny, weight-only elementwise; plain JAX) ----
    u = jnp.linspace(-0.5, 0.5, gabor_len, dtype=jnp.float32)        # (L,)
    u = jnp.broadcast_to(u[None, :], (K, gabor_len))                 # (K, L)
    test1 = gamma[:, None] * jnp.pi / (fwhm[:, None] + 1e-5)
    test2 = u - fwhm[:, None]
    gabor = jnp.exp(-(test1 ** 2) * (test2 ** 2))                    # (K, L)
    # TODO(synk): torch reference ifftshift has no dim= -> shifts over ALL axes;
    # keep that behaviour (even though ifftshift(gabor, axes=-1) may be intended).
    gabor = jnp.fft.ifftshift(gabor)

    # scale[m] = sum_k weights2[k] * gabor[k, m]  -- hoisted out of the kernel
    # (valid because gabor/weights2 are real, applied multiplicatively per-mode)
    scale = jnp.sum(w2 * gabor[:, :M], axis=0)                       # (M,)

    # ---- fold scale into weights1 and build the 2x2 real block weight ----
    wr = (w1r * scale[None, None, :]).astype(jnp.float32)            # (Ci, Co, M)
    wi = (w1i * scale[None, None, :]).astype(jnp.float32)
    wr_m = jnp.transpose(wr, (2, 0, 1))                              # (M, Ci, Co)
    wi_m = jnp.transpose(wi, (2, 0, 1))
    w_block = jnp.concatenate(
        [jnp.concatenate([wr_m, wi_m], axis=2),      # rows multiplying Re(x_ft)
         jnp.concatenate([-wi_m, wr_m], axis=2)],    # rows multiplying Im(x_ft)
        axis=1)                                                      # (M, 2Ci, 2Co)

    # Lane-dense output: pad the last (lane) dim up to a multiple of 128 so the
    # output store is an unmasked full-lane vst (padded weight columns are zero).
    co2 = 2 * Co
    cop = ((co2 + 127) // 128) * 128
    if cop != co2:
        w_block = jnp.pad(w_block, ((0, 0), (0, 0), (0, cop - co2)))

    # ---- forward FFT + Re/Im stacking (glue) ----
    x_ft = jnp.fft.rfft(x, axis=-1)[:, :, :M]                        # (B, Ci, M) complex
    xr = jnp.real(x_ft).astype(jnp.float32)
    xi = jnp.imag(x_ft).astype(jnp.float32)
    x_block = jnp.concatenate(
        [jnp.transpose(xr, (2, 0, 1)), jnp.transpose(xi, (2, 0, 1))],
        axis=2)                                                      # (M, B, 2Ci)

    # ---- Pallas kernel: per-mode (B, 2Ci) @ (2Ci, Cop) on the MXU ----
    per_mode_bytes = 4 * (B * 2 * Ci + 2 * Ci * cop + B * cop)
    tm = _pick_mode_tile(M, per_mode_bytes)
    grid = (M // tm,)

    flops = 2 * M * B * (2 * Ci) * cop
    bytes_accessed = 4 * (x_block.size + w_block.size + M * B * cop)

    out2 = pl.pallas_call(
        _mode_matmul_kernel,
        out_shape=jax.ShapeDtypeStruct((M, B, cop), jnp.float32),
        grid_spec=pltpu.PrefetchScalarGridSpec(
            num_scalar_prefetch=0,
            grid=grid,
            in_specs=[
                pl.BlockSpec((tm, B, 2 * Ci), lambda m: (m, 0, 0)),
                pl.BlockSpec((tm, 2 * Ci, cop), lambda m: (m, 0, 0)),
            ],
            out_specs=pl.BlockSpec((tm, B, cop), lambda m: (m, 0, 0)),
        ),
        compiler_params=pltpu.CompilerParams(
            dimension_semantics=("parallel",)),
        cost_estimate=pl.CostEstimate(
            flops=int(flops), transcendentals=0,
            bytes_accessed=int(bytes_accessed)),
    )(x_block, w_block)

    out_re = jnp.transpose(out2[:, :, :Co], (1, 2, 0))               # (B, Co, M)
    out_im = jnp.transpose(out2[:, :, Co:co2], (1, 2, 0))            # (B, Co, M)

    # ---- assemble full spectrum and inverse FFT (glue) ----
    n_freq = N // 2 + 1
    out_ft = jnp.zeros((B, Co, n_freq), dtype=jnp.complex64)
    out_ft = out_ft.at[:, :, :M].set(out_re + 1j * out_im)
    return jnp.fft.irfft(out_ft, n=N, axis=-1)                       # (B, Co, N)


if __name__ == "__main__":
    key = jax.random.PRNGKey(0)

    # hyper-parameters implied by the module's globals (args.sub/args.len/args.num)
    szie, len_, num = 16, 5, 3
    gabor_len = szie + len_ - 1            # length of the Gabor window

    batch, in_channels, out_channels, modes1 = 2, 4, 4, 8
    N = 16                                  # spatial length; modes1 <= N//2 + 1

    k0, k1, k2, k3 = jax.random.split(key, 4)
    scale = 1.0 / (in_channels * out_channels)
    params = {
        # weights1 = scale * rand(in, out, modes1, dtype=cfloat)
        "w1r": scale * jax.random.uniform(
            k0, (in_channels, out_channels, modes1), jnp.float32),
        "w1i": scale * jax.random.uniform(
            k1, (in_channels, out_channels, modes1), jnp.float32),
        # GaborConv1d parameters
        "gamma": jnp.linspace(0.01, 0.02, num, dtype=jnp.float32),
        "fwhm": jnp.linspace(0.001, 0.002, num, dtype=jnp.float32),
        # weights2 = rand(num, 1)
        "w2": jax.random.uniform(k2, (num, 1), jnp.float32),
    }

    x = jax.random.normal(k3, (batch, in_channels, N), jnp.float32)

    out = spectral_conv1d_forward(x, params, modes1=modes1, gabor_len=gabor_len)
    out = jax.block_until_ready(out)
    assert out.shape == (batch, out_channels, N)
    assert out.dtype == jnp.float32
    print("KERNEL_OK")
</pallas_src>

<mosaic_0001>
module attributes {stable_mosaic.version = 11 : i64} {
  func.func @_mode_matmul_kernel(%arg0: i32, %arg1: memref<4x2x8xf32, #tpu.memory_space<vmem>>, %arg2: memref<4x8x128xf32, #tpu.memory_space<vmem>>, %arg3: memref<4x2x128xf32, #tpu.memory_space<vmem>>) attributes {dimension_semantics = [#tpu.dimension_semantics<parallel>], iteration_bounds = array<i64: 2>, scalar_prefetch = 0 : i64, scratch_operands = 0 : i64, tpu.core_type = #tpu.core_type<tc>, window_params = [{transform_indices = @transform_0, window_bounds = array<i64: 4, 2, 8>}, {transform_indices = @transform_1, window_bounds = array<i64: 4, 8, 128>}, {transform_indices = @transform_2, window_bounds = array<i64: 4, 2, 128>}]} {
    %c0 = arith.constant 0 : index
    %c0_0 = arith.constant 0 : index
    %c0_1 = arith.constant 0 : index
    %0 = vector.load %arg1[%c0, %c0_0, %c0_1] : memref<4x2x8xf32, #tpu.memory_space<vmem>>, vector<4x2x8xf32>
    %c0_2 = arith.constant 0 : index
    %c0_3 = arith.constant 0 : index
    %c0_4 = arith.constant 0 : index
    %1 = vector.load %arg2[%c0_2, %c0_3, %c0_4] : memref<4x8x128xf32, #tpu.memory_space<vmem>>, vector<4x8x128xf32>
    "tpu.trace_start"() <{level = 10 : i32, message = "mbi,mio->mbo"}> : () -> ()
    %cst = arith.constant dense<0.000000e+00> : vector<4x2x128xf32>
    %2 = tpu.matmul %0, %1, %cst {dimension_numbers = #tpu.dot_dimension_numbers<[2], [1], [1], [2], [0, 0, 0, 1, 1, 2], [0], [0]>} : vector<4x2x8xf32>, vector<4x8x128xf32>, vector<4x2x128xf32> -> vector<4x2x128xf32>
    "tpu.trace_stop"() : () -> ()
    %c0_5 = arith.constant 0 : index
    %c0_6 = arith.constant 0 : index
    %c0_7 = arith.constant 0 : index
    %3 = vector.load %arg3[%c0_5, %c0_6, %c0_7] : memref<4x2x128xf32, #tpu.memory_space<vmem>>, vector<4x2x128xf32>
    tpu.vector_store %arg3[%c0_5, %c0_6, %c0_7], %2 {strides = array<i32>} : memref<4x2x128xf32, #tpu.memory_space<vmem>>, vector<4x2x128xf32>,
    return
  }
  func.func @transform_0(%arg0: i32) -> (i32, i32, i32) {
    %c0_i32 = arith.constant 0 : i32
    %c0_i32_0 = arith.constant 0 : i32
    %c0_i32_1 = arith.constant 0 : i32
    return %arg0, %c0_i32, %c0_i32_0 : i32, i32, i32
  }
  func.func @transform_1(%arg0: i32) -> (i32, i32, i32) {
    %c0_i32 = arith.constant 0 : i32
    %c0_i32_0 = arith.constant 0 : i32
    %c0_i32_1 = arith.constant 0 : i32
    return %arg0, %c0_i32, %c0_i32_0 : i32, i32, i32
  }
  func.func @transform_2(%arg0: i32) -> (i32, i32, i32) {
    %c0_i32 = arith.constant 0 : i32
    %c0_i32_0 = arith.constant 0 : i32
    %c0_i32_1 = arith.constant 0 : i32
    return %arg0, %c0_i32, %c0_i32_0 : i32, i32, i32
  }
}

</mosaic_0001>

<llo_original>
// kernel: tpu_custom_call.1
$region0: #{tpu_custom_call.1}
  #allocation0 [shape = 'u32[]', space=smem, size = 0x4, offset = 0x4, fixed_abs, tag = 'smem constant byte address 0x4 - core index']
  #allocation1 [shape = 'u32[144,128]{1,0:T(1,128)}', space=vmem, size = 0x12000, scoped, tag = 'internal scratch']
  %s0 = inlined_call_operand.hbm [shape: f32[8,2,8], index: 0, kind: input, shape index: {}]
  %s1 = inlined_call_operand.hbm [shape: f32[8,8,128], index: 1, kind: input, shape index: {}]
  %s2 = inlined_call_operand.hbm [shape: f32[8,2,128], index: 2, kind: output, shape index: {}]
  %s3 = sld [smem:[#allocation0]]
  $region49: #{tpu_custom_call.1} parent=0
    _
  %s5 = ssub.s32 1, %s3
  %s6 = scalar_select 0, %s5, %s3
  $region1: #{tpu_custom_call.1} parent=0
    #allocation2 [shape = 'u8[8192]{0}', space=vmem, size = 0x2000, scoped, tag = 'input window, operand 0']
    #allocation3 [shape = 's32[2]{0}', space=sflag, size = 0x8, scoped, tag = 'scoped memory for tpu_custom_call.1']
    #allocation4 [shape = 's32[2]{0}', space=sflag, size = 0x8, scoped, tag = 'scoped memory for tpu_custom_call.1']
    #allocation5 [shape = 'u8[32768]{0}', space=vmem, size = 0x8000, scoped, tag = 'input window, operand 1']
    #allocation6 [shape = 's32[2]{0}', space=sflag, size = 0x8, scoped, tag = 'scoped memory for tpu_custom_call.1']
    #allocation7 [shape = 'u8[8192]{0}', space=vmem, size = 0x2000, scoped, tag = 'output window, operand 0']
    %7 = vsyncpa [#allocation3], 0
    %s8 = scalar_lea.sflag [#allocation3], 1
    %9 = vsyncpa %s8, 0
    %10 = vsyncpa [#allocation6], 0
    %s11 = scalar_lea.sflag [#allocation6], 1
    %12 = vsyncpa %s11, 0
    %13 = vsyncpa [#allocation4], 0
    %s14 = scalar_lea.sflag [#allocation4], 1
    %15 = vsyncpa %s14, 0
    loop: start=0, step=1, limit=4
    $region2: #{tpu_custom_call.1} parent=1 // loop_pre_header
      _
    $region3: #{tpu_custom_call.1} parent=1 // loop_header
      %s17 = sphi 0, %s21
      %p18 = scmp.ge.s32.totalorder %s17, 4
      %s27 = sphi 0, %s29
      %s30 = sphi 0, %s27
      %s31 = sphi 0, %s30
      %s47 = sphi 0, %s31
      %s53 = sphi 0, %s55
      %s56 = sphi 0, %s53
      %s57 = sphi 0, %s56
      %s73 = sphi 0, %s57
      %s79 = sphi 0, %s81
      %s82 = sphi 0, %s79
      %s83 = sphi 0, %s82
      %s99 = sphi 0, %s83
    $region4: #{tpu_custom_call.1} parent=1 // loop_header_branch
      %20 = sbr.rel (%p18) target = $region8
    $region5: #{tpu_custom_call.1} parent=1 // loop_body
      %s22 = ssub.s32 %s17, 1
      %s23 = ssub.s32 %s17, 2
      %s24 = sadd.s32 %s17, 1
      %s25 = ssub.s32 %s17, %s24
      %p26 = scmp.eq.s32.totalorder %s25, 0
      %s28 = sadd.s32 %s27, 1
      %s29 = scalar_select %p26, %s27, %s28
      %p32 = pneg %p26
      %p33 = scmp.eq.s32.totalorder %s17, 1
      %p34 = por %p32, %p33
      %p35 = scmp.ne.s32.totalorder %s27, %s30
      %p36 = scmp.eq.s32.totalorder %s17, 0
      %p37 = por %p35, %p36
      %p38 = scmp.ne.s32.totalorder %s27, %s30
      %p39 = scmp.eq.s32.totalorder %s22, 1
      %p40 = por %p38, %p39
      %p41 = scmp.ne.s32.totalorder %s30, %s31
      %p42 = scmp.eq.s32.totalorder %s22, 0
      %p43 = por %p41, %p42
      %p44 = scmp.ne.s32.totalorder %s30, %s31
      %p45 = scmp.eq.s32.totalorder %s23, 1
      %p46 = por %p44, %p45
      %p48 = scmp.ne.s32.totalorder %s31, %s47
      %p49 = scmp.eq.s32.totalorder %s23, 0
      %p50 = por %p48, %p49
      %s51 = ssub.s32 %s17, %s24
      %p52 = scmp.eq.s32.totalorder %s51, 0
      %s54 = sadd.s32 %s53, 1
      %s55 = scalar_select %p52, %s53, %s54
      %p58 = pneg %p52
      %p59 = scmp.eq.s32.totalorder %s17, 1
      %p60 = por %p58, %p59
      %p61 = scmp.ne.s32.totalorder %s53, %s56
      %p62 = scmp.eq.s32.totalorder %s17, 0
      %p63 = por %p61, %p62
      %p64 = scmp.ne.s32.totalorder %s53, %s56
      %p65 = scmp.eq.s32.totalorder %s22, 1
      %p66 = por %p64, %p65
      %p67 = scmp.ne.s32.totalorder %s56, %s57
      %p68 = scmp.eq.s32.totalorder %s22, 0
      %p69 = por %p67, %p68
      %p70 = scmp.ne.s32.totalorder %s56, %s57
      %p71 = scmp.eq.s32.totalorder %s23, 1
      %p72 = por %p70, %p71
      %p74 = scmp.ne.s32.totalorder %s57, %s73
      %p75 = scmp.eq.s32.totalorder %s23, 0
      %p76 = por %p74, %p75
      %s77 = ssub.s32 %s17, %s24
      %p78 = scmp.eq.s32.totalorder %s77, 0
      %s80 = sadd.s32 %s79, 1
      %s81 = scalar_select %p78, %s79, %s80
      %p84 = pneg %p78
      %p85 = scmp.eq.s32.totalorder %s17, 1
      %p86 = por %p84, %p85
      %p87 = scmp.ne.s32.totalorder %s79, %s82
      %p88 = scmp.eq.s32.totalorder %s17, 0
      %p89 = por %p87, %p88
      %p90 = scmp.ne.s32.totalorder %s79, %s82
      %p91 = scmp.eq.s32.totalorder %s22, 1
      %p92 = por %p90, %p91
      %p93 = scmp.ne.s32.totalorder %s82, %s83
      %p94 = scmp.eq.s32.totalorder %s22, 0
      %p95 = por %p93, %p94
      %p96 = scmp.ne.s32.totalorder %s82, %s83
      %p97 = scmp.eq.s32.totalorder %s23, 1
      %p98 = por %p96, %p97
      %p100 = scmp.ne.s32.totalorder %s83, %s99
      %p101 = scmp.eq.s32.totalorder %s23, 0
      %p102 = por %p100, %p101
      %p103 = scmp.le.s32.totalorder 1, %s17
      %p104 = scmp.lt.s32.totalorder %s17, 3
      %p105 = pnand %p103, %p104
      %p106 = pneg %p105
      // Predicated region
      $region9: #{tpu_custom_call.1} parent=5 // pred_check
        _
      $region10: #{tpu_custom_call.1} parent=5 // pred_check_branch
        %108 = sbr.rel (%p105) target = $region12
      $region11: #{tpu_custom_call.1} parent=5 // pred_region
        %s109 = ssub.s32 %s17, 1
      $region12: #{tpu_custom_call.1} parent=5 // pred_fallthru
        _
      %p110 = scmp.lt.s32.totalorder %s17, 2
      // Predicated region
      $region13: #{tpu_custom_call.1} parent=5 // pred_check
        %p111 = pneg %p110
      $region14: #{tpu_custom_call.1} parent=5 // pred_check_branch
        %113 = sbr.rel (%p111) target = $region16
      $region15: #{tpu_custom_call.1} parent=5 // pred_region
        // Predicated region
        $region17: #{tpu_custom_call.1} parent=15 // pred_check
          %p114 = pneg %p37
        $region18: #{tpu_custom_call.1} parent=15 // pred_check_branch
          %116 = sbr.rel (%p114) target = $region20
        $region19: #{tpu_custom_call.1} parent=15 // pred_region
          %s117 = sand.u32 %s27, 1
          %s118 = scalar_lea.sflag [#allocation3], %s117
          %s119 = sand.u32 %s27, 1
          %s120 = smul.addr %s119, 8
          %s121 = scalar_lea.vmem [#allocation2], %s120
          %s122 = smul.u32 4, %s17
          %s124 = ssub.s32 128, 128
          %125 = vsyncadd %s118, %s124
          %s126 = smul.addr %s122, 32
          %s127 = scalar_lea.hbm %s0, %s126
          %s128 = sshll.u32 %s121, 4
          %s129 = int_to_ptr.vmem [resolvable:$true] %s128
          %134 = dma.hbm_to_vmem [thread:$0]  %s127, 128, %s129, %s118, 32, 32, 2
        $region20: #{tpu_custom_call.1} parent=15 // pred_fallthru
          _
        // Predicated region
        $region21: #{tpu_custom_call.1} parent=15 // pred_check
          %p135 = pneg %p63
        $region22: #{tpu_custom_call.1} parent=15 // pred_check_branch
          %137 = sbr.rel (%p135) target = $region24
        $region23: #{tpu_custom_call.1} parent=15 // pred_region
          %s138 = sand.u32 %s53, 1
          %s139 = scalar_lea.sflag [#allocation6], %s138
          %s140 = sand.u32 %s53, 1
          %s141 = smul.addr %s140, 32
          %s142 = scalar_lea.vmem [#allocation5], %s141
          %s143 = smul.u32 4, %s17
          %s145 = ssub.s32 512, 512
          %146 = vsyncadd %s139, %s145
          %s147 = smul.addr %s143, 128
          %s148 = scalar_lea.hbm %s1, %s147
          %s149 = sshll.u32 %s142, 4
          %s150 = int_to_ptr.vmem [resolvable:$true] %s149
          %155 = dma.hbm_to_vmem [thread:$0]  %s148, 512, %s150, %s139, 128, 128, 8
        $region24: #{tpu_custom_call.1} parent=15 // pred_fallthru
          _
      $region16: #{tpu_custom_call.1} parent=5 // pred_fallthru
        _
      %p156 = scmp.le.s32.totalorder 1, %s17
      %p157 = scmp.lt.s32.totalorder %s17, 3
      %p158 = pnand %p156, %p157
      %p159 = pneg %p158
      // Predicated region
      $region25: #{tpu_custom_call.1} parent=5 // pred_check
        _
      $region26: #{tpu_custom_call.1} parent=5 // pred_check_branch
        %161 = sbr.rel (%p158) target = $region28
      $region27: #{tpu_custom_call.1} parent=5 // pred_region
        %s162 = ssub.s32 %s17, 1
        %s163 = sand.u32 %s30, 1
        %s164 = scalar_lea.sflag [#allocation3], %s163
        %s165 = sand.u32 %s30, 1
        %s166 = smul.addr %s165, 8
        %s167 = scalar_lea.vmem [#allocation2], %s166
        // Predicated region
        $region29: #{tpu_custom_call.1} parent=27 // pred_check
          %p168 = pneg %p43
        $region30: #{tpu_custom_call.1} parent=27 // pred_check_branch
          %170 = sbr.rel (%p168) target = $region32
        $region31: #{tpu_custom_call.1} parent=27 // pred_region
          %171 = dma.done %s164, 128
        $region32: #{tpu_custom_call.1} parent=27 // pred_fallthru
          _
        %s172 = sand.u32 %s56, 1
        %s173 = scalar_lea.sflag [#allocation6], %s172
        %s174 = sand.u32 %s56, 1
        %s175 = smul.addr %s174, 32
        %s176 = scalar_lea.vmem [#allocation5], %s175
        // Predicated region
        $region33: #{tpu_custom_call.1} parent=27 // pred_check
          %p177 = pneg %p69
        $region34: #{tpu_custom_call.1} parent=27 // pred_check_branch
          %179 = sbr.rel (%p177) target = $region36
        $region35: #{tpu_custom_call.1} parent=27 // pred_region
          %180 = dma.done %s173, 512
        $region36: #{tpu_custom_call.1} parent=27 // pred_fallthru
          _
        %s181 = sand.u32 %s30, 1
        %s182 = scalar_lea.sflag [#allocation3], %s181
        %s183 = sand.u32 %s30, 1
        %s184 = smul.addr %s183, 8
        %s185 = scalar_lea.vmem [#allocation2], %s184
        %p186 = pneg %p43
        %p187 = pneg %p40
        %s188 = sand.u32 %s56, 1
        %s189 = scalar_lea.sflag [#allocation6], %s188
        %s190 = sand.u32 %s56, 1
        %s191 = smul.addr %s190, 32
        %s192 = scalar_lea.vmem [#allocation5], %s191
        %p193 = pneg %p69
        %p194 = pneg %p66
        %p195 = pneg %p95
        %p196 = pneg %p92
        %s197 = sand.u32 %s82, 1
        %s198 = scalar_lea.sflag [#allocation4], %s197
        %s199 = sand.u32 %s82, 1
        %s200 = smul.addr %s199, 8
        %s201 = scalar_lea.vmem [#allocation7], %s200
        %s202 = smul.u32 4, %s22
        %s203 = smul.u32 4, %s22
        %s204 = smul.u32 4, %s22
        %v205 = vld [vmem:[%s167] sm:$0x3]
        %v206 = vld [vmem:[%s167 + $0x2] sm:$0x3]
        %v207 = vld [vmem:[%s167 + $0x4] sm:$0x3]
        %v208 = vld [vmem:[%s167 + $0x6] sm:$0x3]
        %v209 = vld [vmem:[%s176] sm:$0xff]
        %v210 = vld [vmem:[%s176 + $0x8] sm:$0xff]
        %v211 = vld [vmem:[%s176 + $0x10] sm:$0xff]
        %v212 = vld [vmem:[%s176 + $0x18] sm:$0xff]
        %vm213 = vcmask 64512
        %v215 = vsel %vm213, %v205, 0
        %217 = vmatprep.subr.mxu0 0.0
        %218 = vmatpush1.msra.mxu0 0.0
        %219 = vmatprep.subr.mxu0 0.0
        %220 = vmatpush1.msra.mxu0 0.0
        %221 = vmatprep.subr.mxu0 0.0
        %222 = vmatpush1.msra.mxu0 0.0
        %223 = vmatprep.subr.mxu0 0.0
        %224 = vmatpush1.msra.mxu0 0.0
        %225 = vmatprep.subr.mxu0 0.0
        %226 = vmatpush1.msra.mxu0 0.0
        %227 = vmatprep.subr.mxu0 0.0
        %228 = vmatpush1.msra.mxu0 0.0
        %229 = vmatprep.subr.mxu0 0.0
        %230 = vmatpush1.msra.mxu0 0.0
        %231 = vmatprep.subr.mxu0 0.0
        %232 = vmatpush1.msra.mxu0 0.0
        %233 = vmatprep.subr.mxu0 0.0
        %234 = vmatpush1.msra.mxu0 0.0
        %235 = vmatprep.subr.mxu0 0.0
        %236 = vmatpush1.msra.mxu0 0.0
        %237 = vmatprep.subr.mxu0 0.0
        %238 = vmatpush1.msra.mxu0 0.0
        %239 = vmatprep.subr.mxu0 0.0
        %240 = vmatpush1.msra.mxu0 0.0
        %241 = vmatprep.subr.mxu0 0.0
        %242 = vmatpush1.msra.mxu0 0.0
        %243 = vmatprep.subr.mxu0 0.0
        %244 = vmatpush1.msra.mxu0 0.0
        %245 = vmatprep.subr.mxu0 0.0
        %246 = vmatpush1.msra.mxu0 0.0
        %247 = vmatprep.subr.mxu0 0.0
        %248 = vmatpush1.msra.mxu0 %v209
        %249 = vmatprep.subr.mxu0 0.0
        %250 = vmatpush2.msra.mxu0 0.0
        %251 = vmatprep.subr.mxu0 0.0
        %252 = vmatpush2.msra.mxu0 0.0
        %253 = vmatprep.subr.mxu0 0.0
        %254 = vmatpush2.msra.mxu0 0.0
        %255 = vmatprep.subr.mxu0 0.0
        %256 = vmatpush2.msra.mxu0 0.0
        %257 = vmatprep.subr.mxu0 0.0
        %258 = vmatpush2.msra.mxu0 0.0
        %259 = vmatprep.subr.mxu0 0.0
        %260 = vmatpush2.msra.mxu0 0.0
        %261 = vmatprep.subr.mxu0 0.0
        %262 = vmatpush2.msra.mxu0 0.0
        %263 = vmatprep.subr.mxu0 0.0
        %264 = vmatpush2.msra.mxu0 0.0
        %265 = vmatprep.subr.mxu0 0.0
        %266 = vmatpush2.msra.mxu0 0.0
        %267 = vmatprep.subr.mxu0 0.0
        %268 = vmatpush2.msra.mxu0 0.0
        %269 = vmatprep.subr.mxu0 0.0
        %270 = vmatpush2.msra.mxu0 0.0
        %271 = vmatprep.subr.mxu0 0.0
        %272 = vmatpush2.msra.mxu0 0.0
        %273 = vmatprep.subr.mxu0 0.0
        %274 = vmatpush2.msra.mxu0 0.0
        %275 = vmatprep.subr.mxu0 0.0
        %276 = vmatpush2.msra.mxu0 0.0
        %277 = vmatprep.subr.mxu0 0.0
        %278 = vmatpush2.msra.mxu0 0.0
        %279 = vmatprep.subr.mxu0 0.0
        %280 = vmatpush2.msra.mxu0 0.0
        %281 = vmatprep.mubr.f32.mxu0 0.0
        %282 = vmatmul.mubr.f32.gmra.mxu0 %v215
        %v283 = vpop.f32.mrf.mxu0
        %v284 = vadd.f32 0.0, %v283
        %v285 = vpop.f32.mrf.mxu0
        %286 = vdwg.mxu0
        %v288 = vsel %vm213, %v206, 0
        %290 = vmatprep.subr.mxu0 0.0
        %291 = vmatpush1.msra.mxu0 0.0
        %292 = vmatprep.subr.mxu0 0.0
        %293 = vmatpush1.msra.mxu0 0.0
        %294 = vmatprep.subr.mxu0 0.0
        %295 = vmatpush1.msra.mxu0 0.0
        %296 = vmatprep.subr.mxu0 0.0
        %297 = vmatpush1.msra.mxu0 0.0
        %298 = vmatprep.subr.mxu0 0.0
        %299 = vmatpush1.msra.mxu0 0.0
        %300 = vmatprep.subr.mxu0 0.0
        %301 = vmatpush1.msra.mxu0 0.0
        %302 = vmatprep.subr.mxu0 0.0
        %303 = vmatpush1.msra.mxu0 0.0
        %304 = vmatprep.subr.mxu0 0.0
        %305 = vmatpush1.msra.mxu0 0.0
        %306 = vmatprep.subr.mxu0 0.0
        %307 = vmatpush1.msra.mxu0 0.0
        %308 = vmatprep.subr.mxu0 0.0
        %309 = vmatpush1.msra.mxu0 0.0
        %310 = vmatprep.subr.mxu0 0.0
        %311 = vmatpush1.msra.mxu0 0.0
        %312 = vmatprep.subr.mxu0 0.0
        %313 = vmatpush1.msra.mxu0 0.0
        %314 = vmatprep.subr.mxu0 0.0
        %315 = vmatpush1.msra.mxu0 0.0
        %316 = vmatprep.subr.mxu0 0.0
        %317 = vmatpush1.msra.mxu0 0.0
        %318 = vmatprep.subr.mxu0 0.0
        %319 = vmatpush1.msra.mxu0 0.0
        %320 = vmatprep.subr.mxu0 0.0
        %321 = vmatpush1.msra.mxu0 %v210
        %322 = vmatprep.subr.mxu0 0.0
        %323 = vmatpush2.msra.mxu0 0.0
        %324 = vmatprep.subr.mxu0 0.0
        %325 = vmatpush2.msra.mxu0 0.0
        %326 = vmatprep.subr.mxu0 0.0
        %327 = vmatpush2.msra.mxu0 0.0
        %328 = vmatprep.subr.mxu0 0.0
        %329 = vmatpush2.msra.mxu0 0.0
        %330 = vmatprep.subr.mxu0 0.0
        %331 = vmatpush2.msra.mxu0 0.0
        %332 = vmatprep.subr.mxu0 0.0
        %333 = vmatpush2.msra.mxu0 0.0
        %334 = vmatprep.subr.mxu0 0.0
        %335 = vmatpush2.msra.mxu0 0.0
        %336 = vmatprep.subr.mxu0 0.0
        %337 = vmatpush2.msra.mxu0 0.0
        %338 = vmatprep.subr.mxu0 0.0
        %339 = vmatpush2.msra.mxu0 0.0
        %340 = vmatprep.subr.mxu0 0.0
        %341 = vmatpush2.msra.mxu0 0.0
        %342 = vmatprep.subr.mxu0 0.0
        %343 = vmatpush2.msra.mxu0 0.0
        %344 = vmatprep.subr.mxu0 0.0
        %345 = vmatpush2.msra.mxu0 0.0
        %346 = vmatprep.subr.mxu0 0.0
        %347 = vmatpush2.msra.mxu0 0.0
        %348 = vmatprep.subr.mxu0 0.0
        %349 = vmatpush2.msra.mxu0 0.0
        %350 = vmatprep.subr.mxu0 0.0
        %351 = vmatpush2.msra.mxu0 0.0
        %352 = vmatprep.subr.mxu0 0.0
        %353 = vmatpush2.msra.mxu0 0.0
        %354 = vmatprep.mubr.f32.mxu0 0.0
        %355 = vmatmul.mubr.f32.gmra.mxu0 %v288
        %v356 = vpop.f32.mrf.mxu0
        %v357 = vadd.f32 0.0, %v356
        %v358 = vpop.f32.mrf.mxu0
        %359 = vdwg.mxu0
        %v361 = vsel %vm213, %v207, 0
        %363 = vmatprep.subr.mxu0 0.0
        %364 = vmatpush1.msra.mxu0 0.0
        %365 = vmatprep.subr.mxu0 0.0
        %366 = vmatpush1.msra.mxu0 0.0
        %367 = vmatprep.subr.mxu0 0.0
        %368 = vmatpush1.msra.mxu0 0.0
        %369 = vmatprep.subr.mxu0 0.0
        %370 = vmatpush1.msra.mxu0 0.0
        %371 = vmatprep.subr.mxu0 0.0
        %372 = vmatpush1.msra.mxu0 0.0
        %373 = vmatprep.subr.mxu0 0.0
        %374 = vmatpush1.msra.mxu0 0.0
        %375 = vmatprep.subr.mxu0 0.0
        %376 = vmatpush1.msra.mxu0 0.0
        %377 = vmatprep.subr.mxu0 0.0
        %378 = vmatpush1.msra.mxu0 0.0
        %379 = vmatprep.subr.mxu0 0.0
        %380 = vmatpush1.msra.mxu0 0.0
        %381 = vmatprep.subr.mxu0 0.0
        %382 = vmatpush1.msra.mxu0 0.0
        %383 = vmatprep.subr.mxu0 0.0
        %384 = vmatpush1.msra.mxu0 0.0
        %385 = vmatprep.subr.mxu0 0.0
        %386 = vmatpush1.msra.mxu0 0.0
        %387 = vmatprep.subr.mxu0 0.0
        %388 = vmatpush1.msra.mxu0 0.0
        %389 = vmatprep.subr.mxu0 0.0
        %390 = vmatpush1.msra.mxu0 0.0
        %391 = vmatprep.subr.mxu0 0.0
        %392 = vmatpush1.msra.mxu0 0.0
        %393 = vmatprep.subr.mxu0 0.0
        %394 = vmatpush1.msra.mxu0 %v211
        %395 = vmatprep.subr.mxu0 0.0
        %396 = vmatpush2.msra.mxu0 0.0
        %397 = vmatprep.subr.mxu0 0.0
        %398 = vmatpush2.msra.mxu0 0.0
        %399 = vmatprep.subr.mxu0 0.0
        %400 = vmatpush2.msra.mxu0 0.0
        %401 = vmatprep.subr.mxu0 0.0
        %402 = vmatpush2.msra.mxu0 0.0
        %403 = vmatprep.subr.mxu0 0.0
        %404 = vmatpush2.msra.mxu0 0.0
        %405 = vmatprep.subr.mxu0 0.0
        %406 = vmatpush2.msra.mxu0 0.0
        %407 = vmatprep.subr.mxu0 0.0
        %408 = vmatpush2.msra.mxu0 0.0
        %409 = vmatprep.subr.mxu0 0.0
        %410 = vmatpush2.msra.mxu0 0.0
        %411 = vmatprep.subr.mxu0 0.0
        %412 = vmatpush2.msra.mxu0 0.0
        %413 = vmatprep.subr.mxu0 0.0
        %414 = vmatpush2.msra.mxu0 0.0
        %415 = vmatprep.subr.mxu0 0.0
        %416 = vmatpush2.msra.mxu0 0.0
        %417 = vmatprep.subr.mxu0 0.0
        %418 = vmatpush2.msra.mxu0 0.0
        %419 = vmatprep.subr.mxu0 0.0
        %420 = vmatpush2.msra.mxu0 0.0
        %421 = vmatprep.subr.mxu0 0.0
        %422 = vmatpush2.msra.mxu0 0.0
        %423 = vmatprep.subr.mxu0 0.0
        %424 = vmatpush2.msra.mxu0 0.0
        %425 = vmatprep.subr.mxu0 0.0
        %426 = vmatpush2.msra.mxu0 0.0
        %427 = vmatprep.mubr.f32.mxu0 0.0
        %428 = vmatmul.mubr.f32.gmra.mxu0 %v361
        %v429 = vpop.f32.mrf.mxu0
        %v430 = vadd.f32 0.0, %v429
        %v431 = vpop.f32.mrf.mxu0
        %432 = vdwg.mxu0
        %v434 = vsel %vm213, %v208, 0
        %436 = vmatprep.subr.mxu0 0.0
        %437 = vmatpush1.msra.mxu0 0.0
        %438 = vmatprep.subr.mxu0 0.0
        %439 = vmatpush1.msra.mxu0 0.0
        %440 = vmatprep.subr.mxu0 0.0
        %441 = vmatpush1.msra.mxu0 0.0
        %442 = vmatprep.subr.mxu0 0.0
        %443 = vmatpush1.msra.mxu0 0.0
        %444 = vmatprep.subr.mxu0 0.0
        %445 = vmatpush1.msra.mxu0 0.0
        %446 = vmatprep.subr.mxu0 0.0
        %447 = vmatpush1.msra.mxu0 0.0
        %448 = vmatprep.subr.mxu0 0.0
        %449 = vmatpush1.msra.mxu0 0.0
        %450 = vmatprep.subr.mxu0 0.0
        %451 = vmatpush1.msra.mxu0 0.0
        %452 = vmatprep.subr.mxu0 0.0
        %453 = vmatpush1.msra.mxu0 0.0
        %454 = vmatprep.subr.mxu0 0.0
        %455 = vmatpush1.msra.mxu0 0.0
        %456 = vmatprep.subr.mxu0 0.0
        %457 = vmatpush1.msra.mxu0 0.0
        %458 = vmatprep.subr.mxu0 0.0
        %459 = vmatpush1.msra.mxu0 0.0
        %460 = vmatprep.subr.mxu0 0.0
        %461 = vmatpush1.msra.mxu0 0.0
        %462 = vmatprep.subr.mxu0 0.0
        %463 = vmatpush1.msra.mxu0 0.0
        %464 = vmatprep.subr.mxu0 0.0
        %465 = vmatpush1.msra.mxu0 0.0
        %466 = vmatprep.subr.mxu0 0.0
        %467 = vmatpush1.msra.mxu0 %v212
        %468 = vmatprep.subr.mxu0 0.0
        %469 = vmatpush2.msra.mxu0 0.0
        %470 = vmatprep.subr.mxu0 0.0
        %471 = vmatpush2.msra.mxu0 0.0
        %472 = vmatprep.subr.mxu0 0.0
        %473 = vmatpush2.msra.mxu0 0.0
        %474 = vmatprep.subr.mxu0 0.0
        %475 = vmatpush2.msra.mxu0 0.0
        %476 = vmatprep.subr.mxu0 0.0
        %477 = vmatpush2.msra.mxu0 0.0
        %478 = vmatprep.subr.mxu0 0.0
        %479 = vmatpush2.msra.mxu0 0.0
        %480 = vmatprep.subr.mxu0 0.0
        %481 = vmatpush2.msra.mxu0 0.0
        %482 = vmatprep.subr.mxu0 0.0
        %483 = vmatpush2.msra.mxu0 0.0
        %484 = vmatprep.subr.mxu0 0.0
        %485 = vmatpush2.msra.mxu0 0.0
        %486 = vmatprep.subr.mxu0 0.0
        %487 = vmatpush2.msra.mxu0 0.0
        %488 = vmatprep.subr.mxu0 0.0
        %489 = vmatpush2.msra.mxu0 0.0
        %490 = vmatprep.subr.mxu0 0.0
        %491 = vmatpush2.msra.mxu0 0.0
        %492 = vmatprep.subr.mxu0 0.0
        %493 = vmatpush2.msra.mxu0 0.0
        %494 = vmatprep.subr.mxu0 0.0
        %495 = vmatpush2.msra.mxu0 0.0
        %496 = vmatprep.subr.mxu0 0.0
        %497 = vmatpush2.msra.mxu0 0.0
        %498 = vmatprep.subr.mxu0 0.0
        %499 = vmatpush2.msra.mxu0 0.0
        %500 = vmatprep.mubr.f32.mxu0 0.0
        %501 = vmatmul.mubr.f32.gmra.mxu0 %v434
        %v502 = vpop.f32.mrf.mxu0
        %v503 = vadd.f32 0.0, %v502
        %v504 = vpop.f32.mrf.mxu0
        %505 = vdwg.mxu0
        %506 = vst [vmem:[%s201] sm:$0x3] %v284
        %507 = vst [vmem:[%s201 + $0x2] sm:$0x3] %v357
        %508 = vst [vmem:[%s201 + $0x4] sm:$0x3] %v430
        %509 = vst [vmem:[%s201 + $0x6] sm:$0x3] %v503
        %s510 = sand.u32 %s82, 1
        %s511 = scalar_lea.sflag [#allocation4], %s510
        %s512 = sand.u32 %s82, 1
        %s513 = smul.addr %s512, 8
        %s514 = scalar_lea.vmem [#allocation7], %s513
        // Predicated region
        $region37: #{tpu_custom_call.1} parent=27 // pred_check
          %p515 = pneg %p92
        $region38: #{tpu_custom_call.1} parent=27 // pred_check_branch
          %517 = sbr.rel (%p515) target = $region40
        $region39: #{tpu_custom_call.1} parent=27 // pred_region
          %s518 = smul.u32 4, %s22
          %s520 = ssub.s32 128, 128
          %521 = vsyncadd %s511, %s520
          %s522 = smul.addr %s518, 32
          %s523 = scalar_lea.hbm %s2, %s522
          %s524 = sshll.u32 %s514, 4
          %s525 = int_to_ptr.vmem [resolvable:$true] %s524
          %530 = dma.vmem_to_hbm [thread:$0]  %s525, 128, %s523, %s511, 32, 32, 2
        $region40: #{tpu_custom_call.1} parent=27 // pred_fallthru
          _
      $region28: #{tpu_custom_call.1} parent=5 // pred_fallthru
        _
      %p531 = scmp.le.s32.totalorder 2, %s17
      // Predicated region
      $region41: #{tpu_custom_call.1} parent=5 // pred_check
        %p532 = pneg %p531
      $region42: #{tpu_custom_call.1} parent=5 // pred_check_branch
        %534 = sbr.rel (%p532) target = $region44
      $region43: #{tpu_custom_call.1} parent=5 // pred_region
        %s535 = ssub.s32 %s17, 2
        // Predicated region
        $region45: #{tpu_custom_call.1} parent=43 // pred_check
          %p536 = pneg %p98
        $region46: #{tpu_custom_call.1} parent=43 // pred_check_branch
          %538 = sbr.rel (%p536) target = $region48
        $region47: #{tpu_custom_call.1} parent=43 // pred_region
          %s539 = sand.u32 %s83, 1
          %s540 = scalar_lea.sflag [#allocation4], %s539
          %s541 = sand.u32 %s83, 1
          %s542 = smul.addr %s541, 8
          %s543 = scalar_lea.vmem [#allocation7], %s542
          %544 = dma.done %s540, 128
        $region48: #{tpu_custom_call.1} parent=43 // pred_fallthru
          _
      $region44: #{tpu_custom_call.1} parent=5 // pred_fallthru
        _
    $region6: #{tpu_custom_call.1} parent=1 // loop_footer
      %s21 = sadd.s32 1, %s17
    $region7: #{tpu_custom_call.1} parent=1 // loop_footer_branch
      %16 = sbr.rel target = $region3
    $region8: #{tpu_custom_call.1} parent=1 // loop_exit
      _
    %545 = vsyncpa [#allocation3], 1
    %s546 = scalar_lea.sflag [#allocation3], 1
    %547 = vsyncpa %s546, 1
    %548 = vsyncpa [#allocation6], 1
    %s549 = scalar_lea.sflag [#allocation6], 1
    %550 = vsyncpa %s549, 1
    %551 = vsyncpa [#allocation4], 1
    %s552 = scalar_lea.sflag [#allocation4], 1
    %553 = vsyncpa %s552, 1

</llo_original>
